<compile_context>
chip_gen: v7x
topology: tpu7x:2x2x1
jax: 0.10.0
libtpu: 0.0.40
codegen_flags: <defaults>
</compile_context>

<pallas_src>
import functools

import jax
import jax.numpy as jnp
from jax.experimental import pallas as pl
from jax.experimental.pallas import tpu as pltpu


def _round_up(x, m):
    return (x + m - 1) // m * m


def _conv_compress_kernel(x_ref, w_ref, b_ref, o_ref, acc_ref):
    # x_ref: (tm, tk) flattened conv windows
    # w_ref: (tk, tn) folded conv weight
    # b_ref: (1, tn)  conv bias
    # o_ref: (tm, tn) compressed memory tile
    # acc_ref: (tm, tn) f32 accumulator, resident across the K axis
    k = pl.program_id(2)

    @pl.when(k == 0)
    def _():
        acc_ref[...] = jnp.zeros_like(acc_ref)

    acc_ref[...] += jnp.dot(x_ref[...], w_ref[...],
                            preferred_element_type=jnp.float32)

    @pl.when(k == pl.num_programs(2) - 1)
    def _():
        o_ref[...] = (acc_ref[...] + b_ref[...].astype(jnp.float32)
                      ).astype(o_ref.dtype)


def fold_conv_weight(weight):
    """Fold PyTorch Conv1d weight (D_out, D_in, ratio) -> (ratio*D_in, D_out).

    Row layout is k*D_in + c_in, matching the window fold of `mem`.
    Do this ONCE per weight (hoisted out of the per-call path)."""
    d_out, d_in, ratio = weight.shape
    return jnp.transpose(weight, (2, 1, 0)).reshape(ratio * d_in, d_out)


def conv_compress_folded(mem, w2d, bias, ratio, *, compute_dtype=None,
                         tm_max=512, tk_max=2048, tn_max=512):
    """mem: (B, S, D); w2d: (ratio*D, D_out) pre-folded weight; bias: (D_out,).
    Returns (B, S//ratio, D_out).

    compute_dtype=jnp.bfloat16 casts the MXU operands (accumulation stays f32),
    which is the fast path on v6e/v7x; default keeps the input dtype exact."""
    B, S, D = mem.shape
    assert S % ratio == 0, "seq length must be divisible by ratio (Conv1d has no padding)"
    S_out = S // ratio
    M, K = B * S_out, ratio * D
    K_w, N = w2d.shape
    assert K_w == K, "folded weight does not match (ratio * d_model)"

    # Free contiguous reshape: non-overlapping windows -> matmul rows.
    x2d = mem.reshape(M, K)

    if compute_dtype is not None:
        x2d = x2d.astype(compute_dtype)
        w2d = w2d.astype(compute_dtype)

    # MXU/lane-friendly tile sizes: tm multiple of 8 (16 for bf16) rows,
    # tk/tn multiples of 128 lanes.  Defaults (512, 2048, 512) keep
    # x/w/out double-buffers + f32 accumulator well under 32 MiB scoped VMEM,
    # so they also fit v7x's 64 MiB physical VMEM.
    sub = 16 if x2d.dtype == jnp.bfloat16 else 8
    tm = min(tm_max, _round_up(M, sub))
    tk = min(tk_max, _round_up(K, 128))
    tn = min(tn_max, _round_up(N, 128))

    # Pad so every block is full (avoids masked partial vregs / lane-sparse
    # stores for small D, and satisfies the (8, 128) BlockSpec rule).
    M_p, K_p, N_p = _round_up(M, tm), _round_up(K, tk), _round_up(N, tn)
    if (M_p, K_p) != (M, K):
        x2d = jnp.pad(x2d, ((0, M_p - M), (0, K_p - K)))
    if (K_p, N_p) != (K, N):
        w2d = jnp.pad(w2d, ((0, K_p - K), (0, N_p - N)))
    b2d = bias.reshape(1, N)
    if N_p != N:
        b2d = jnp.pad(b2d, ((0, 0), (0, N_p - N)))

    grid = (M_p // tm, N_p // tn, K_p // tk)

    out_dtype = mem.dtype
    cost = pl.CostEstimate(
        flops=2 * M_p * K_p * N_p,
        transcendentals=0,
        bytes_accessed=(x2d.size * x2d.dtype.itemsize
                        + grid[0] * w2d.size * w2d.dtype.itemsize
                        + b2d.size * b2d.dtype.itemsize
                        + M_p * N_p * jnp.dtype(out_dtype).itemsize),
    )

    out2d = pl.pallas_call(
        _conv_compress_kernel,
        out_shape=jax.ShapeDtypeStruct((M_p, N_p), out_dtype),
        grid_spec=pltpu.PrefetchScalarGridSpec(
            num_scalar_prefetch=0,
            grid=grid,
            in_specs=[
                # x tiles stream over (M, K)
                pl.BlockSpec((tm, tk), lambda i, j, k: (i, k)),
                # weight: independent of i -> stays VMEM-resident across M tiles
                # whenever K fits a single tile (the common case).
                pl.BlockSpec((tk, tn), lambda i, j, k: (k, j)),
                # bias: one lane-dense row per N tile
                pl.BlockSpec((1, tn), lambda i, j, k: (0, j)),
            ],
            out_specs=pl.BlockSpec((tm, tn), lambda i, j, k: (i, j)),
            scratch_shapes=[pltpu.VMEM((tm, tn), jnp.float32)],
        ),
        compiler_params=pltpu.CompilerParams(
            # M and N tiles are independent -> shard across v7x's 2 TCs;
            # K is the reduction axis (accumulator) -> "arbitrary", innermost.
            dimension_semantics=("parallel", "parallel", "arbitrary")),
        cost_estimate=cost,
    )(x2d, w2d, b2d)

    return out2d[:M, :N].reshape(B, S_out, N)


def conv_compress(mem, weight, bias, ratio, **kwargs):
    """Convenience wrapper taking the raw PyTorch Conv1d weight (D_out, D_in, ratio)."""
    return conv_compress_folded(mem, fold_conv_weight(weight), bias, ratio, **kwargs)


def _reference(mem, weight, bias, ratio):
    # Pure-JAX reference mirroring PyTorch Conv1d(stride=ratio, k=ratio, groups=1).
    B, S, D = mem.shape
    S_out = S // ratio
    x = mem.reshape(B, S_out, ratio, D)  # non-overlapping windows
    # out[b,t,o] = sum_{c,k} x[b,t,k,c] * W[o,c,k] + bias[o]
    return jnp.einsum("btkc,ock->bto", x, weight) + bias[None, None, :]


if __name__ == "__main__":
    key = jax.random.PRNGKey(0)
    k_mem, k_w, k_b = jax.random.split(key, 3)

    B, S, D, ratio = 2, 8, 32, 4  # small shapes consistent with the module

    mem = jax.random.normal(k_mem, (B, S, D), dtype=jnp.float32)
    # Deterministic synthetic Conv1d params: weight (D_out, D_in, ratio), bias (D_out,)
    fan_in = D * ratio
    bound = 1.0 / (fan_in ** 0.5)
    weight = jax.random.uniform(k_w, (D, D, ratio), jnp.float32, -bound, bound)
    bias = jax.random.uniform(k_b, (D,), jnp.float32, -bound, bound)

    # Fold the weight once (hoisted out of the per-call path), then run.
    w2d = fold_conv_weight(weight)
    run = jax.jit(functools.partial(conv_compress_folded, ratio=ratio))
    out = run(mem, w2d, bias)
    out = jax.block_until_ready(out)

    ref = _reference(mem, weight, bias, ratio)
    assert out.shape == (B, S // ratio, D)
    assert jnp.allclose(out, ref, atol=1e-4, rtol=1e-4)

    print("KERNEL_OK")
</pallas_src>

<mosaic_0001>
module attributes {stable_mosaic.version = 11 : i64} {
  func.func @_conv_compress_kernel(%arg0: i32, %arg1: i32, %arg2: i32, %arg3: memref<8x128xf32, #tpu.memory_space<vmem>>, %arg4: memref<128x128xf32, #tpu.memory_space<vmem>>, %arg5: memref<1x128xf32, #tpu.memory_space<vmem>>, %arg6: memref<8x128xf32, #tpu.memory_space<vmem>>, %arg7: memref<8x128xf32, #tpu.memory_space<vmem>>) attributes {dimension_semantics = [#tpu.dimension_semantics<parallel>, #tpu.dimension_semantics<parallel>, #tpu.dimension_semantics<arbitrary>], iteration_bounds = array<i64: 1, 1, 1>, scalar_prefetch = 0 : i64, scratch_operands = 1 : i64, tpu.core_type = #tpu.core_type<tc>, window_params = [{transform_indices = @transform_0, window_bounds = array<i64: 8, 128>}, {transform_indices = @transform_1, window_bounds = array<i64: 128, 128>}, {transform_indices = @transform_2, window_bounds = array<i64: 1, 128>}, {transform_indices = @transform_3, window_bounds = array<i64: 8, 128>}]} {
    %c0_i32 = arith.constant 0 : i32
    %0 = arith.cmpi eq, %arg2, %c0_i32 : i32
    %1 = arith.extui %0 : i1 to i32
    %c0_i32_0 = arith.constant 0 : i32
    %2 = arith.cmpi ne, %1, %c0_i32_0 : i32
    scf.if %2 {
      %cst_10 = arith.constant 0.000000e+00 : f32
      %12 = vector.broadcast %cst_10 : f32 to vector<8x128xf32>
      %c0_11 = arith.constant 0 : index
      %c0_12 = arith.constant 0 : index
      %13 = vector.load %arg7[%c0_11, %c0_12] : memref<8x128xf32, #tpu.memory_space<vmem>>, vector<8x128xf32>
      tpu.vector_store %arg7[%c0_11, %c0_12], %12 {strides = array<i32>} : memref<8x128xf32, #tpu.memory_space<vmem>>, vector<8x128xf32>,
    } else {
    }
    %c0 = arith.constant 0 : index
    %c0_1 = arith.constant 0 : index
    %3 = vector.load %arg7[%c0, %c0_1] : memref<8x128xf32, #tpu.memory_space<vmem>>, vector<8x128xf32>
    %c0_2 = arith.constant 0 : index
    %c0_3 = arith.constant 0 : index
    %4 = vector.load %arg3[%c0_2, %c0_3] : memref<8x128xf32, #tpu.memory_space<vmem>>, vector<8x128xf32>
    %c0_4 = arith.constant 0 : index
    %c0_5 = arith.constant 0 : index
    %5 = vector.load %arg4[%c0_4, %c0_5] : memref<128x128xf32, #tpu.memory_space<vmem>>, vector<128x128xf32>
    %cst = arith.constant dense<0.000000e+00> : vector<8x128xf32>
    %6 = tpu.matmul %4, %5, %cst {dimension_numbers = #tpu.dot_dimension_numbers<[1], [0], [0], [1], [0, 0, 1, 1], [], []>} : vector<8x128xf32>, vector<128x128xf32>, vector<8x128xf32> -> vector<8x128xf32>
    %7 = arith.addf %3, %6 : vector<8x128xf32>
    %c0_6 = arith.constant 0 : index
    %c0_7 = arith.constant 0 : index
    %8 = vector.load %arg7[%c0_6, %c0_7] : memref<8x128xf32, #tpu.memory_space<vmem>>, vector<8x128xf32>
    tpu.vector_store %arg7[%c0_6, %c0_7], %7 {strides = array<i32>} : memref<8x128xf32, #tpu.memory_space<vmem>>, vector<8x128xf32>,
    %c0_i32_8 = arith.constant 0 : i32
    %9 = arith.cmpi eq, %arg2, %c0_i32_8 : i32
    %10 = arith.extui %9 : i1 to i32
    %c0_i32_9 = arith.constant 0 : i32
    %11 = arith.cmpi ne, %10, %c0_i32_9 : i32
    scf.if %11 {
      %c0_10 = arith.constant 0 : index
      %c0_11 = arith.constant 0 : index
      %12 = vector.load %arg7[%c0_10, %c0_11] : memref<8x128xf32, #tpu.memory_space<vmem>>, vector<8x128xf32>
      %c0_12 = arith.constant 0 : index
      %c0_13 = arith.constant 0 : index
      %13 = vector.load %arg5[%c0_12, %c0_13] : memref<1x128xf32, #tpu.memory_space<vmem>>, vector<1x128xf32>
      %14 = vector.broadcast %13 : vector<1x128xf32> to vector<8x128xf32>
      %15 = arith.addf %12, %14 : vector<8x128xf32>
      %c0_14 = arith.constant 0 : index
      %c0_15 = arith.constant 0 : index
      %16 = vector.load %arg6[%c0_14, %c0_15] : memref<8x128xf32, #tpu.memory_space<vmem>>, vector<8x128xf32>
      tpu.vector_store %arg6[%c0_14, %c0_15], %15 {strides = array<i32>} : memref<8x128xf32, #tpu.memory_space<vmem>>, vector<8x128xf32>,
    } else {
    }
    return
  }
  func.func @transform_0(%arg0: i32, %arg1: i32, %arg2: i32) -> (i32, i32) {
    %c0_i32 = arith.constant 0 : i32
    return %arg0, %arg2 : i32, i32
  }
  func.func @transform_1(%arg0: i32, %arg1: i32, %arg2: i32) -> (i32, i32) {
    %c0_i32 = arith.constant 0 : i32
    return %arg2, %arg1 : i32, i32
  }
  func.func @transform_2(%arg0: i32, %arg1: i32, %arg2: i32) -> (i32, i32) {
    %c0_i32 = arith.constant 0 : i32
    %c0_i32_0 = arith.constant 0 : i32
    return %c0_i32, %arg1 : i32, i32
  }
  func.func @transform_3(%arg0: i32, %arg1: i32, %arg2: i32) -> (i32, i32) {
    %c0_i32 = arith.constant 0 : i32
    return %arg0, %arg1 : i32, i32
  }
}

</mosaic_0001>

<llo_original>
// kernel: conv_compress_folded.1
$region0: #{conv_compress_folded.1}
  #allocation0 [shape = 'u32[]', space=smem, size = 0x4, offset = 0x4, fixed_abs, tag = 'smem constant byte address 0x4 - core index']
  #allocation1 [shape = 'u32[144,128]{1,0:T(1,128)}', space=vmem, size = 0x12000, scoped, tag = 'internal scratch']
  #allocation2 [shape = 'f32[8,128]{1,0:T(8,128)}', space=vmem, size = 0x1000, scoped, tag = 'scratch operand']
  %s0 = inlined_call_operand.vmem [shape: f32[8,128], index: 0, kind: input, shape index: {}]
  %s1 = inlined_call_operand.vmem [shape: f32[128,128], index: 1, kind: input, shape index: {}]
  %s2 = inlined_call_operand.vmem [shape: f32[1,128], index: 2, kind: input, shape index: {}]
  %s3 = inlined_call_operand.vmem [shape: f32[8,128], index: 3, kind: output, shape index: {}]
  %s4 = sld [smem:[#allocation0]]
  $region30: #{conv_compress_folded.1} parent=0
    _
  %s6 = ssub.s32 1, %s4
  %s7 = scalar_select 0, %s6, %s4
  // Predicated region
  $region2: #{conv_compress_folded.1} parent=0 // pred_check
    _
  $region3: #{conv_compress_folded.1} parent=0 // pred_check_branch
    %9 = sbr.rel (0) target = $region5
  $region4: #{conv_compress_folded.1} parent=0 // pred_region
    _
  $region5: #{conv_compress_folded.1} parent=0 // pred_fallthru
    _
  // Predicated region
  $region6: #{conv_compress_folded.1} parent=0 // pred_check
    _
  $region7: #{conv_compress_folded.1} parent=0 // pred_check_branch
    %11 = sbr.rel (0) target = $region9
  $region8: #{conv_compress_folded.1} parent=0 // pred_region
    _
  $region9: #{conv_compress_folded.1} parent=0 // pred_fallthru
    _
  // Predicated region
  $region10: #{conv_compress_folded.1} parent=0 // pred_check
    _
  $region11: #{conv_compress_folded.1} parent=0 // pred_check_branch
    %13 = sbr.rel (0) target = $region13
  $region12: #{conv_compress_folded.1} parent=0 // pred_region
    _
  $region13: #{conv_compress_folded.1} parent=0 // pred_fallthru
    _
  %p14 = scmp.eq.s32.totalorder 0, 0
  // Predicated region
  $region14: #{conv_compress_folded.1} parent=0 // pred_check
    %p15 = pneg %p14
  $region15: #{conv_compress_folded.1} parent=0 // pred_check_branch
    %17 = sbr.rel (%p15) target = $region17
  $region16: #{conv_compress_folded.1} parent=0 // pred_region
    %18 = vst [vmem:[#allocation2] sm:$0xff] 0.0
  $region17: #{conv_compress_folded.1} parent=0 // pred_fallthru
    _
  %v19 = vld [vmem:[#allocation2] sm:$0xff]
  %v20 = vld [vmem:[%s0] sm:$0xff]
  %v21 = vld [vmem:[%s1] sm:$0xff]
  %v22 = vld [vmem:[%s1 + $0x8] sm:$0xff]
  %v23 = vld [vmem:[%s1 + $0x10] sm:$0xff]
  %v24 = vld [vmem:[%s1 + $0x18] sm:$0xff]
  %v25 = vld [vmem:[%s1 + $0x20] sm:$0xff]
  %v26 = vld [vmem:[%s1 + $0x28] sm:$0xff]
  %v27 = vld [vmem:[%s1 + $0x30] sm:$0xff]
  %v28 = vld [vmem:[%s1 + $0x38] sm:$0xff]
  %v29 = vld [vmem:[%s1 + $0x40] sm:$0xff]
  %v30 = vld [vmem:[%s1 + $0x48] sm:$0xff]
  %v31 = vld [vmem:[%s1 + $0x50] sm:$0xff]
  %v32 = vld [vmem:[%s1 + $0x58] sm:$0xff]
  %v33 = vld [vmem:[%s1 + $0x60] sm:$0xff]
  %v34 = vld [vmem:[%s1 + $0x68] sm:$0xff]
  %v35 = vld [vmem:[%s1 + $0x70] sm:$0xff]
  %v36 = vld [vmem:[%s1 + $0x78] sm:$0xff]
  %37 = vmatprep.subr.mxu0 0.0
  %38 = vmatpush1.msra.mxu0 %v21
  %39 = vmatprep.subr.mxu0 0.0
  %40 = vmatpush1.msra.mxu0 %v22
  %41 = vmatprep.subr.mxu0 0.0
  %42 = vmatpush1.msra.mxu0 %v23
  %43 = vmatprep.subr.mxu0 0.0
  %44 = vmatpush1.msra.mxu0 %v24
  %45 = vmatprep.subr.mxu0 0.0
  %46 = vmatpush1.msra.mxu0 %v25
  %47 = vmatprep.subr.mxu0 0.0
  %48 = vmatpush1.msra.mxu0 %v26
  %49 = vmatprep.subr.mxu0 0.0
  %50 = vmatpush1.msra.mxu0 %v27
  %51 = vmatprep.subr.mxu0 0.0
  %52 = vmatpush1.msra.mxu0 %v28
  %53 = vmatprep.subr.mxu0 0.0
  %54 = vmatpush1.msra.mxu0 %v29
  %55 = vmatprep.subr.mxu0 0.0
  %56 = vmatpush1.msra.mxu0 %v30
  %57 = vmatprep.subr.mxu0 0.0
  %58 = vmatpush1.msra.mxu0 %v31
  %59 = vmatprep.subr.mxu0 0.0
  %60 = vmatpush1.msra.mxu0 %v32
  %61 = vmatprep.subr.mxu0 0.0
  %62 = vmatpush1.msra.mxu0 %v33
  %63 = vmatprep.subr.mxu0 0.0
  %64 = vmatpush1.msra.mxu0 %v34
  %65 = vmatprep.subr.mxu0 0.0
  %66 = vmatpush1.msra.mxu0 %v35
  %67 = vmatprep.subr.mxu0 0.0
  %68 = vmatpush1.msra.mxu0 %v36
  %69 = vmatprep.subr.mxu0 0.0
  %70 = vmatpush1.msra.mxu0 0.0
  %71 = vmatprep.subr.mxu0 0.0
  %72 = vmatpush1.msra.mxu0 0.0
  %73 = vmatprep.subr.mxu0 0.0
  %74 = vmatpush1.msra.mxu0 0.0
  %75 = vmatprep.subr.mxu0 0.0
  %76 = vmatpush1.msra.mxu0 0.0
  %77 = vmatprep.subr.mxu0 0.0
  %78 = vmatpush1.msra.mxu0 0.0
  %79 = vmatprep.subr.mxu0 0.0
  %80 = vmatpush1.msra.mxu0 0.0
  %81 = vmatprep.subr.mxu0 0.0
  %82 = vmatpush1.msra.mxu0 0.0
  %83 = vmatprep.subr.mxu0 0.0
  %84 = vmatpush1.msra.mxu0 0.0
  %85 = vmatprep.subr.mxu0 0.0
  %86 = vmatpush1.msra.mxu0 0.0
  %87 = vmatprep.subr.mxu0 0.0
  %88 = vmatpush1.msra.mxu0 0.0
  %89 = vmatprep.subr.mxu0 0.0
  %90 = vmatpush1.msra.mxu0 0.0
  %91 = vmatprep.subr.mxu0 0.0
  %92 = vmatpush1.msra.mxu0 0.0
  %93 = vmatprep.subr.mxu0 0.0
  %94 = vmatpush1.msra.mxu0 0.0
  %95 = vmatprep.subr.mxu0 0.0
  %96 = vmatpush1.msra.mxu0 0.0
  %97 = vmatprep.subr.mxu0 0.0
  %98 = vmatpush1.msra.mxu0 0.0
  %99 = vmatprep.subr.mxu0 0.0
  %100 = vmatpush1.msra.mxu0 0.0
  %101 = vmatprep.mubr.f32.mxu0 0.0
  %102 = vmatmul.mubr.f32.gmra.mrb[0].mxu0 %v20
  %v103 = vpop.f32.mrb[0].mxu0
  %v104 = vadd.f32 0.0, %v103
  %v105 = vpop.f32.mrb[0].mxu0
  %106 = vdwg.mxu0
  %v107 = vadd.f32 %v19, %v104
  %108 = vst [vmem:[#allocation2] sm:$0xff] %v107
  // Predicated region
  $region18: #{conv_compress_folded.1} parent=0 // pred_check
    %p109 = pneg %p14
  $region19: #{conv_compress_folded.1} parent=0 // pred_check_branch
    %111 = sbr.rel (%p109) target = $region21
  $region20: #{conv_compress_folded.1} parent=0 // pred_region
    %v112 = vld [vmem:[#allocation2] sm:$0xff]
    %v113 = vld [vmem:[%s2] sm:$0x1]
    %v115 = vlaneseq
    %v116 = vshrl.u32 %v115, 7
    %v117 = vsub.s32 0, %v116
    %v118 = vrot.slane %v113, %v117
    %v120 = vadd.f32 %v112, %v118
    %121 = vst [vmem:[%s3] sm:$0xff] %v120
  $region21: #{conv_compress_folded.1} parent=0 // pred_fallthru
    _
  // Predicated region
  $region22: #{conv_compress_folded.1} parent=0 // pred_check
    _
  $region23: #{conv_compress_folded.1} parent=0 // pred_check_branch
    %123 = sbr.rel (0) target = $region25
  $region24: #{conv_compress_folded.1} parent=0 // pred_region
    _
  $region25: #{conv_compress_folded.1} parent=0 // pred_fallthru
    _
  // Predicated region
  $region26: #{conv_compress_folded.1} parent=0 // pred_check
    _
  $region27: #{conv_compress_folded.1} parent=0 // pred_check_branch
    %125 = sbr.rel (0) target = $region29
  $region28: #{conv_compress_folded.1} parent=0 // pred_region
    _
  $region29: #{conv_compress_folded.1} parent=0 // pred_fallthru
    _

</llo_original>
